<compile_context>
chip_gen: v7x
topology: tpu7x:2x2x1
jax: 0.10.0
libtpu: 0.0.40
codegen_flags: <defaults>
</compile_context>

<pallas_src>
import jax
import jax.numpy as jnp
from jax.experimental import pallas as pl
from jax.experimental.pallas import tpu as pltpu

LANE = 128  # TPU lane width; FC output padded to this for an unmasked store.


def prepare_kernel_params(params):
    """One-time parameter massaging (constant fold, done OUTSIDE the kernel).

    * Fold the 0.5 pre-scale of the sigmoid-via-tanh trick into the i/f/o
      columns of W_ih, W_hh and the bias.
    * Build per-lane scale/offset vectors for the post-tanh affine
      (0.5*a + 0.5 on i/f/o lanes, identity on the g lanes).
    * Pad the FC weight/bias to a lane-dense 128-wide output.
    """
    w_ih_t, w_hh_t, bias, w_fc_t, b_fc = params
    H = w_hh_t.shape[0]
    O = w_fc_t.shape[1]

    lane = jnp.arange(4 * H)
    is_g = (lane >= 2 * H) & (lane < 3 * H)
    pre = jnp.where(is_g, 1.0, 0.5).astype(jnp.float32)          # tanh-arg pre-scale
    sig_scale = jnp.where(is_g, 1.0, 0.5).astype(jnp.float32)[None, :]
    sig_offset = jnp.where(is_g, 0.0, 0.5).astype(jnp.float32)[None, :]

    w_ih_s = w_ih_t * pre[None, :]
    w_hh_s = w_hh_t * pre[None, :]
    bias_s = bias * pre[None, :]

    w_fc_pad = jnp.zeros((H, LANE), jnp.float32).at[:, :O].set(w_fc_t)
    b_fc_pad = jnp.zeros((1, LANE), jnp.float32).at[:, :O].set(b_fc)

    return (w_ih_s, w_hh_s, bias_s, sig_scale, sig_offset, w_fc_pad, b_fc_pad, O)


def lstm_classifier_forward(x, kparams, h0, c0):
    """x: (seq_len, batch, input_dim) float32 (time-major, PyTorch default).

    Returns fc(ht[-1]) with shape (batch, output_dim).
    """
    S, B, D = x.shape
    (w_ih_s, w_hh_s, bias_s, sig_scale, sig_offset,
     w_fc_pad, b_fc_pad, O) = kparams
    H = w_hh_s.shape[0]

    # Free wrapper-side reshape: time-major rows so the input projection is a
    # single (S*B, D) x (D, 4H) matmul inside the kernel.
    x2d = x.reshape(S * B, D)

    def kernel(x_ref, wih_ref, whh_ref, b_ref, sscale_ref, soff_ref,
               h0_ref, c0_ref, wfc_ref, bfc_ref, out_ref, gx_sc):
        # ---- Hoisted input projection (off the serial h->h chain) ----------
        # The 0.5 i/f/o pre-scale is already folded into wih/whh/bias.
        gx_sc[...] = (
            jnp.dot(x_ref[...], wih_ref[...],
                    preferred_element_type=jnp.float32)
            + b_ref[...])                                        # (S*B, 4H)

        # Post-tanh affine constants, broadcast ONCE outside the unrolled loop
        # (JAX does not CSE broadcast_in_dim; keep it off the per-step path).
        sscale = jnp.broadcast_to(sscale_ref[...], (B, 4 * H))
        soff = jnp.broadcast_to(soff_ref[...], (B, 4 * H))

        def step(t, carry):
            h, c = carry
            row = pl.multiple_of(t * B, B)
            gx_t = gx_sc[pl.ds(row, B), :]                       # (B, 4H)
            gates = gx_t + jnp.dot(h, whh_ref[...],
                                   preferred_element_type=jnp.float32)
            # One EUP tanh push for all 4 gates, then one full-width VPU
            # mul+add turns the i/f/o lanes into sigmoids (g lanes identity).
            act = jnp.tanh(gates) * sscale + soff
            i = act[:, 0 * H:1 * H]
            f = act[:, 1 * H:2 * H]
            g = act[:, 2 * H:3 * H]
            o = act[:, 3 * H:4 * H]
            c_new = f * c + i * g
            h_new = o * jnp.tanh(c_new)
            return h_new, c_new

        # Recurrence as an in-kernel fully-unrolled loop (no grid overhead).
        h_fin, _ = jax.lax.fori_loop(
            0, S, step, (h0_ref[...], c0_ref[...]), unroll=True)

        # Fused, lane-dense (B, 128) final Linear on ht[-1] (unmasked store).
        out_ref[...] = (
            jnp.dot(h_fin, wfc_ref[...], preferred_element_type=jnp.float32)
            + bfc_ref[...]).astype(out_ref.dtype)

    vmem = lambda: pl.BlockSpec(memory_space=pltpu.MemorySpace.VMEM)
    out_pad = pl.pallas_call(
        kernel,
        out_shape=jax.ShapeDtypeStruct((B, LANE), jnp.float32),
        in_specs=[vmem() for _ in range(10)],
        out_specs=vmem(),
        scratch_shapes=[pltpu.VMEM((S * B, 4 * H), jnp.float32)],  # gates_x
    )(x2d, w_ih_s, w_hh_s, bias_s, sig_scale, sig_offset,
      h0, c0, w_fc_pad, b_fc_pad)
    return out_pad[:, :O]


def _reference_forward(x, params, h0, c0):
    """Pure-JAX reference of the same forward (correctness check)."""
    w_ih_t, w_hh_t, bias, w_fc_t, b_fc = params
    H = w_hh_t.shape[0]

    def step(carry, x_t):
        h, c = carry
        gates = x_t @ w_ih_t + h @ w_hh_t + bias[0]
        i = jax.nn.sigmoid(gates[:, 0 * H:1 * H])
        f = jax.nn.sigmoid(gates[:, 1 * H:2 * H])
        g = jnp.tanh(gates[:, 2 * H:3 * H])
        o = jax.nn.sigmoid(gates[:, 3 * H:4 * H])
        c = f * c + i * g
        h = o * jnp.tanh(c)
        return (h, c), None

    (h, _), _ = jax.lax.scan(step, (h0, c0), x)
    return h @ w_fc_t + b_fc[0]


def init_params(key, input_dim, hidden_dim, output_dim):
    """Deterministic init mimicking PyTorch's uniform(-1/sqrt(H), 1/sqrt(H))."""
    ks = jax.random.split(key, 6)
    bound = 1.0 / jnp.sqrt(hidden_dim)
    u = lambda k, shape, b: jax.random.uniform(k, shape, jnp.float32, -b, b)
    w_ih = u(ks[0], (4 * hidden_dim, input_dim), bound)   # PyTorch layout
    w_hh = u(ks[1], (4 * hidden_dim, hidden_dim), bound)
    b_ih = u(ks[2], (4 * hidden_dim,), bound)
    b_hh = u(ks[3], (4 * hidden_dim,), bound)
    w_fc = u(ks[4], (output_dim, hidden_dim), bound)
    b_fc = u(ks[5], (output_dim,), bound)
    # Pre-transpose to right-multiply layout for the kernel.
    return (w_ih.T, w_hh.T, (b_ih + b_hh)[None, :], w_fc.T, b_fc[None, :])


if __name__ == "__main__":
    seq_len, batch, input_dim, hidden_dim, output_dim = 8, 8, 16, 32, 8

    key = jax.random.PRNGKey(0)
    k_x, k_p, k_h, k_c = jax.random.split(key, 4)

    x = jax.random.normal(k_x, (seq_len, batch, input_dim), jnp.float32)
    params = init_params(k_p, input_dim, hidden_dim, output_dim)
    # init_hidden() uses torch.randn; here: deterministic normal draws.
    h0 = jax.random.normal(k_h, (batch, hidden_dim), jnp.float32)
    c0 = jax.random.normal(k_c, (batch, hidden_dim), jnp.float32)

    # One-time constant fold of the gate pre-scale / FC padding.
    kparams = prepare_kernel_params(params)

    out = lstm_classifier_forward(x, kparams, h0, c0)
    jax.block_until_ready(out)

    ref = _reference_forward(x, params, h0, c0)
    assert out.shape == (batch, output_dim)
    assert jnp.allclose(out, ref, atol=1e-4, rtol=1e-4), "mismatch vs reference"

    print("KERNEL_OK")
</pallas_src>

<mosaic_0001>
module attributes {stable_mosaic.version = 11 : i64} {
  func.func @kernel(%arg0: memref<64x16xf32, #tpu.memory_space<vmem>>, %arg1: memref<16x128xf32, #tpu.memory_space<vmem>>, %arg2: memref<32x128xf32, #tpu.memory_space<vmem>>, %arg3: memref<1x128xf32, #tpu.memory_space<vmem>>, %arg4: memref<1x128xf32, #tpu.memory_space<vmem>>, %arg5: memref<1x128xf32, #tpu.memory_space<vmem>>, %arg6: memref<8x32xf32, #tpu.memory_space<vmem>>, %arg7: memref<8x32xf32, #tpu.memory_space<vmem>>, %arg8: memref<32x128xf32, #tpu.memory_space<vmem>>, %arg9: memref<1x128xf32, #tpu.memory_space<vmem>>, %arg10: memref<8x128xf32, #tpu.memory_space<vmem>>, %arg11: memref<64x128xf32, #tpu.memory_space<vmem>>) attributes {dimension_semantics = [], scalar_prefetch = 0 : i64, scratch_operands = 1 : i64, tpu.core_type = #tpu.core_type<tc>} {
    %c0 = arith.constant 0 : index
    %c0_0 = arith.constant 0 : index
    %0 = vector.load %arg0[%c0, %c0_0] : memref<64x16xf32, #tpu.memory_space<vmem>>, vector<64x16xf32>
    %c0_1 = arith.constant 0 : index
    %c0_2 = arith.constant 0 : index
    %1 = vector.load %arg1[%c0_1, %c0_2] : memref<16x128xf32, #tpu.memory_space<vmem>>, vector<16x128xf32>
    %cst = arith.constant dense<0.000000e+00> : vector<64x128xf32>
    %2 = tpu.matmul %0, %1, %cst {dimension_numbers = #tpu.dot_dimension_numbers<[1], [0], [0], [1], [0, 0, 1, 1], [], []>} : vector<64x16xf32>, vector<16x128xf32>, vector<64x128xf32> -> vector<64x128xf32>
    %c0_3 = arith.constant 0 : index
    %c0_4 = arith.constant 0 : index
    %3 = vector.load %arg3[%c0_3, %c0_4] : memref<1x128xf32, #tpu.memory_space<vmem>>, vector<1x128xf32>
    %4 = vector.broadcast %3 : vector<1x128xf32> to vector<64x128xf32>
    %5 = arith.addf %2, %4 : vector<64x128xf32>
    %c0_5 = arith.constant 0 : index
    %c0_6 = arith.constant 0 : index
    %6 = vector.load %arg11[%c0_5, %c0_6] : memref<64x128xf32, #tpu.memory_space<vmem>>, vector<64x128xf32>
    tpu.vector_store %arg11[%c0_5, %c0_6], %5 {strides = array<i32>} : memref<64x128xf32, #tpu.memory_space<vmem>>, vector<64x128xf32>,
    %c0_7 = arith.constant 0 : index
    %c0_8 = arith.constant 0 : index
    %7 = vector.load %arg4[%c0_7, %c0_8] : memref<1x128xf32, #tpu.memory_space<vmem>>, vector<1x128xf32>
    %8 = vector.shape_cast %7 : vector<1x128xf32> to vector<1x128xf32>
    %9 = vector.broadcast %8 : vector<1x128xf32> to vector<8x128xf32>
    %c0_9 = arith.constant 0 : index
    %c0_10 = arith.constant 0 : index
    %10 = vector.load %arg5[%c0_9, %c0_10] : memref<1x128xf32, #tpu.memory_space<vmem>>, vector<1x128xf32>
    %11 = vector.shape_cast %10 : vector<1x128xf32> to vector<1x128xf32>
    %12 = vector.broadcast %11 : vector<1x128xf32> to vector<8x128xf32>
    %c0_11 = arith.constant 0 : index
    %c0_12 = arith.constant 0 : index
    %13 = vector.load %arg6[%c0_11, %c0_12] : memref<8x32xf32, #tpu.memory_space<vmem>>, vector<8x32xf32>
    %c0_13 = arith.constant 0 : index
    %c0_14 = arith.constant 0 : index
    %14 = vector.load %arg7[%c0_13, %c0_14] : memref<8x32xf32, #tpu.memory_space<vmem>>, vector<8x32xf32>
    %c0_i32 = arith.constant 0 : i32
    %c8_i32 = arith.constant 8 : i32
    %15 = arith.muli %c0_i32, %c8_i32 : i32
    %16 = tpu.assume_multiple %15, 8 : i32
    %17 = arith.index_cast %16 : i32 to index
    %c0_15 = arith.constant 0 : index
    %18 = vector.load %arg11[%17, %c0_15] : memref<64x128xf32, #tpu.memory_space<vmem>>, vector<8x128xf32>
    %c0_16 = arith.constant 0 : index
    %c0_17 = arith.constant 0 : index
    %19 = vector.load %arg2[%c0_16, %c0_17] : memref<32x128xf32, #tpu.memory_space<vmem>>, vector<32x128xf32>
    %cst_18 = arith.constant dense<0.000000e+00> : vector<8x128xf32>
    %20 = tpu.matmul %13, %19, %cst_18 {dimension_numbers = #tpu.dot_dimension_numbers<[1], [0], [0], [1], [0, 0, 1, 1], [], []>} : vector<8x32xf32>, vector<32x128xf32>, vector<8x128xf32> -> vector<8x128xf32>
    %21 = arith.addf %18, %20 : vector<8x128xf32>
    %22 = math.tanh %21 : vector<8x128xf32>
    %23 = arith.mulf %22, %9 : vector<8x128xf32>
    %24 = arith.addf %23, %12 : vector<8x128xf32>
    %25 = vector.extract_strided_slice %24 {offsets = [0, 0], sizes = [8, 32], strides = [1, 1]} : vector<8x128xf32> to vector<8x32xf32>
    %26 = vector.extract_strided_slice %24 {offsets = [0, 32], sizes = [8, 32], strides = [1, 1]} : vector<8x128xf32> to vector<8x32xf32>
    %27 = vector.extract_strided_slice %24 {offsets = [0, 64], sizes = [8, 32], strides = [1, 1]} : vector<8x128xf32> to vector<8x32xf32>
    %28 = vector.extract_strided_slice %24 {offsets = [0, 96], sizes = [8, 32], strides = [1, 1]} : vector<8x128xf32> to vector<8x32xf32>
    %29 = arith.mulf %26, %14 : vector<8x32xf32>
    %30 = arith.mulf %25, %27 : vector<8x32xf32>
    %31 = arith.addf %29, %30 : vector<8x32xf32>
    %32 = math.tanh %31 : vector<8x32xf32>
    %33 = arith.mulf %28, %32 : vector<8x32xf32>
    %c1_i32 = arith.constant 1 : i32
    %c8_i32_19 = arith.constant 8 : i32
    %34 = arith.muli %c1_i32, %c8_i32_19 : i32
    %35 = tpu.assume_multiple %34, 8 : i32
    %36 = arith.index_cast %35 : i32 to index
    %c0_20 = arith.constant 0 : index
    %37 = vector.load %arg11[%36, %c0_20] : memref<64x128xf32, #tpu.memory_space<vmem>>, vector<8x128xf32>
    %c0_21 = arith.constant 0 : index
    %c0_22 = arith.constant 0 : index
    %38 = vector.load %arg2[%c0_21, %c0_22] : memref<32x128xf32, #tpu.memory_space<vmem>>, vector<32x128xf32>
    %cst_23 = arith.constant dense<0.000000e+00> : vector<8x128xf32>
    %39 = tpu.matmul %33, %38, %cst_23 {dimension_numbers = #tpu.dot_dimension_numbers<[1], [0], [0], [1], [0, 0, 1, 1], [], []>} : vector<8x32xf32>, vector<32x128xf32>, vector<8x128xf32> -> vector<8x128xf32>
    %40 = arith.addf %37, %39 : vector<8x128xf32>
    %41 = math.tanh %40 : vector<8x128xf32>
    %42 = arith.mulf %41, %9 : vector<8x128xf32>
    %43 = arith.addf %42, %12 : vector<8x128xf32>
    %44 = vector.extract_strided_slice %43 {offsets = [0, 0], sizes = [8, 32], strides = [1, 1]} : vector<8x128xf32> to vector<8x32xf32>
    %45 = vector.extract_strided_slice %43 {offsets = [0, 32], sizes = [8, 32], strides = [1, 1]} : vector<8x128xf32> to vector<8x32xf32>
    %46 = vector.extract_strided_slice %43 {offsets = [0, 64], sizes = [8, 32], strides = [1, 1]} : vector<8x128xf32> to vector<8x32xf32>
    %47 = vector.extract_strided_slice %43 {offsets = [0, 96], sizes = [8, 32], strides = [1, 1]} : vector<8x128xf32> to vector<8x32xf32>
    %48 = arith.mulf %45, %31 : vector<8x32xf32>
    %49 = arith.mulf %44, %46 : vector<8x32xf32>
    %50 = arith.addf %48, %49 : vector<8x32xf32>
    %51 = math.tanh %50 : vector<8x32xf32>
    %52 = arith.mulf %47, %51 : vector<8x32xf32>
    %c2_i32 = arith.constant 2 : i32
    %c8_i32_24 = arith.constant 8 : i32
    %53 = arith.muli %c2_i32, %c8_i32_24 : i32
    %54 = tpu.assume_multiple %53, 8 : i32
    %55 = arith.index_cast %54 : i32 to index
    %c0_25 = arith.constant 0 : index
    %56 = vector.load %arg11[%55, %c0_25] : memref<64x128xf32, #tpu.memory_space<vmem>>, vector<8x128xf32>
    %c0_26 = arith.constant 0 : index
    %c0_27 = arith.constant 0 : index
    %57 = vector.load %arg2[%c0_26, %c0_27] : memref<32x128xf32, #tpu.memory_space<vmem>>, vector<32x128xf32>
    %cst_28 = arith.constant dense<0.000000e+00> : vector<8x128xf32>
    %58 = tpu.matmul %52, %57, %cst_28 {dimension_numbers = #tpu.dot_dimension_numbers<[1], [0], [0], [1], [0, 0, 1, 1], [], []>} : vector<8x32xf32>, vector<32x128xf32>, vector<8x128xf32> -> vector<8x128xf32>
    %59 = arith.addf %56, %58 : vector<8x128xf32>
    %60 = math.tanh %59 : vector<8x128xf32>
    %61 = arith.mulf %60, %9 : vector<8x128xf32>
    %62 = arith.addf %61, %12 : vector<8x128xf32>
    %63 = vector.extract_strided_slice %62 {offsets = [0, 0], sizes = [8, 32], strides = [1, 1]} : vector<8x128xf32> to vector<8x32xf32>
    %64 = vector.extract_strided_slice %62 {offsets = [0, 32], sizes = [8, 32], strides = [1, 1]} : vector<8x128xf32> to vector<8x32xf32>
    %65 = vector.extract_strided_slice %62 {offsets = [0, 64], sizes = [8, 32], strides = [1, 1]} : vector<8x128xf32> to vector<8x32xf32>
    %66 = vector.extract_strided_slice %62 {offsets = [0, 96], sizes = [8, 32], strides = [1, 1]} : vector<8x128xf32> to vector<8x32xf32>
    %67 = arith.mulf %64, %50 : vector<8x32xf32>
    %68 = arith.mulf %63, %65 : vector<8x32xf32>
    %69 = arith.addf %67, %68 : vector<8x32xf32>
    %70 = math.tanh %69 : vector<8x32xf32>
    %71 = arith.mulf %66, %70 : vector<8x32xf32>
    %c3_i32 = arith.constant 3 : i32
    %c8_i32_29 = arith.constant 8 : i32
    %72 = arith.muli %c3_i32, %c8_i32_29 : i32
    %73 = tpu.assume_multiple %72, 8 : i32
    %74 = arith.index_cast %73 : i32 to index
    %c0_30 = arith.constant 0 : index
    %75 = vector.load %arg11[%74, %c0_30] : memref<64x128xf32, #tpu.memory_space<vmem>>, vector<8x128xf32>
    %c0_31 = arith.constant 0 : index
    %c0_32 = arith.constant 0 : index
    %76 = vector.load %arg2[%c0_31, %c0_32] : memref<32x128xf32, #tpu.memory_space<vmem>>, vector<32x128xf32>
    %cst_33 = arith.constant dense<0.000000e+00> : vector<8x128xf32>
    %77 = tpu.matmul %71, %76, %cst_33 {dimension_numbers = #tpu.dot_dimension_numbers<[1], [0], [0], [1], [0, 0, 1, 1], [], []>} : vector<8x32xf32>, vector<32x128xf32>, vector<8x128xf32> -> vector<8x128xf32>
    %78 = arith.addf %75, %77 : vector<8x128xf32>
    %79 = math.tanh %78 : vector<8x128xf32>
    %80 = arith.mulf %79, %9 : vector<8x128xf32>
    %81 = arith.addf %80, %12 : vector<8x128xf32>
    %82 = vector.extract_strided_slice %81 {offsets = [0, 0], sizes = [8, 32], strides = [1, 1]} : vector<8x128xf32> to vector<8x32xf32>
    %83 = vector.extract_strided_slice %81 {offsets = [0, 32], sizes = [8, 32], strides = [1, 1]} : vector<8x128xf32> to vector<8x32xf32>
    %84 = vector.extract_strided_slice %81 {offsets = [0, 64], sizes = [8, 32], strides = [1, 1]} : vector<8x128xf32> to vector<8x32xf32>
    %85 = vector.extract_strided_slice %81 {offsets = [0, 96], sizes = [8, 32], strides = [1, 1]} : vector<8x128xf32> to vector<8x32xf32>
    %86 = arith.mulf %83, %69 : vector<8x32xf32>
    %87 = arith.mulf %82, %84 : vector<8x32xf32>
    %88 = arith.addf %86, %87 : vector<8x32xf32>
    %89 = math.tanh %88 : vector<8x32xf32>
    %90 = arith.mulf %85, %89 : vector<8x32xf32>
    %c4_i32 = arith.constant 4 : i32
    %c8_i32_34 = arith.constant 8 : i32
    %91 = arith.muli %c4_i32, %c8_i32_34 : i32
    %92 = tpu.assume_multiple %91, 8 : i32
    %93 = arith.index_cast %92 : i32 to index
    %c0_35 = arith.constant 0 : index
    %94 = vector.load %arg11[%93, %c0_35] : memref<64x128xf32, #tpu.memory_space<vmem>>, vector<8x128xf32>
    %c0_36 = arith.constant 0 : index
    %c0_37 = arith.constant 0 : index
    %95 = vector.load %arg2[%c0_36, %c0_37] : memref<32x128xf32, #tpu.memory_space<vmem>>, vector<32x128xf32>
    %cst_38 = arith.constant dense<0.000000e+00> : vector<8x128xf32>
    %96 = tpu.matmul %90, %95, %cst_38 {dimension_numbers = #tpu.dot_dimension_numbers<[1], [0], [0], [1], [0, 0, 1, 1], [], []>} : vector<8x32xf32>, vector<32x128xf32>, vector<8x128xf32> -> vector<8x128xf32>
    %97 = arith.addf %94, %96 : vector<8x128xf32>
    %98 = math.tanh %97 : vector<8x128xf32>
    %99 = arith.mulf %98, %9 : vector<8x128xf32>
    %100 = arith.addf %99, %12 : vector<8x128xf32>
    %101 = vector.extract_strided_slice %100 {offsets = [0, 0], sizes = [8, 32], strides = [1, 1]} : vector<8x128xf32> to vector<8x32xf32>
    %102 = vector.extract_strided_slice %100 {offsets = [0, 32], sizes = [8, 32], strides = [1, 1]} : vector<8x128xf32> to vector<8x32xf32>
    %103 = vector.extract_strided_slice %100 {offsets = [0, 64], sizes = [8, 32], strides = [1, 1]} : vector<8x128xf32> to vector<8x32xf32>
    %104 = vector.extract_strided_slice %100 {offsets = [0, 96], sizes = [8, 32], strides = [1, 1]} : vector<8x128xf32> to vector<8x32xf32>
    %105 = arith.mulf %102, %88 : vector<8x32xf32>
    %106 = arith.mulf %101, %103 : vector<8x32xf32>
    %107 = arith.addf %105, %106 : vector<8x32xf32>
    %108 = math.tanh %107 : vector<8x32xf32>
    %109 = arith.mulf %104, %108 : vector<8x32xf32>
    %c5_i32 = arith.constant 5 : i32
    %c8_i32_39 = arith.constant 8 : i32
    %110 = arith.muli %c5_i32, %c8_i32_39 : i32
    %111 = tpu.assume_multiple %110, 8 : i32
    %112 = arith.index_cast %111 : i32 to index
    %c0_40 = arith.constant 0 : index
    %113 = vector.load %arg11[%112, %c0_40] : memref<64x128xf32, #tpu.memory_space<vmem>>, vector<8x128xf32>
    %c0_41 = arith.constant 0 : index
    %c0_42 = arith.constant 0 : index
    %114 = vector.load %arg2[%c0_41, %c0_42] : memref<32x128xf32, #tpu.memory_space<vmem>>, vector<32x128xf32>
    %cst_43 = arith.constant dense<0.000000e+00> : vector<8x128xf32>
    %115 = tpu.matmul %109, %114, %cst_43 {dimension_numbers = #tpu.dot_dimension_numbers<[1], [0], [0], [1], [0, 0, 1, 1], [], []>} : vector<8x32xf32>, vector<32x128xf32>, vector<8x128xf32> -> vector<8x128xf32>
    %116 = arith.addf %113, %115 : vector<8x128xf32>
    %117 = math.tanh %116 : vector<8x128xf32>
    %118 = arith.mulf %117, %9 : vector<8x128xf32>
    %119 = arith.addf %118, %12 : vector<8x128xf32>
    %120 = vector.extract_strided_slice %119 {offsets = [0, 0], sizes = [8, 32], strides = [1, 1]} : vector<8x128xf32> to vector<8x32xf32>
    %121 = vector.extract_strided_slice %119 {offsets = [0, 32], sizes = [8, 32], strides = [1, 1]} : vector<8x128xf32> to vector<8x32xf32>
    %122 = vector.extract_strided_slice %119 {offsets = [0, 64], sizes = [8, 32], strides = [1, 1]} : vector<8x128xf32> to vector<8x32xf32>
    %123 = vector.extract_strided_slice %119 {offsets = [0, 96], sizes = [8, 32], strides = [1, 1]} : vector<8x128xf32> to vector<8x32xf32>
    %124 = arith.mulf %121, %107 : vector<8x32xf32>
    %125 = arith.mulf %120, %122 : vector<8x32xf32>
    %126 = arith.addf %124, %125 : vector<8x32xf32>
    %127 = math.tanh %126 : vector<8x32xf32>
    %128 = arith.mulf %123, %127 : vector<8x32xf32>
    %c6_i32 = arith.constant 6 : i32
    %c8_i32_44 = arith.constant 8 : i32
    %129 = arith.muli %c6_i32, %c8_i32_44 : i32
    %130 = tpu.assume_multiple %129, 8 : i32
    %131 = arith.index_cast %130 : i32 to index
    %c0_45 = arith.constant 0 : index
    %132 = vector.load %arg11[%131, %c0_45] : memref<64x128xf32, #tpu.memory_space<vmem>>, vector<8x128xf32>
    %c0_46 = arith.constant 0 : index
    %c0_47 = arith.constant 0 : index
    %133 = vector.load %arg2[%c0_46, %c0_47] : memref<32x128xf32, #tpu.memory_space<vmem>>, vector<32x128xf32>
    %cst_48 = arith.constant dense<0.000000e+00> : vector<8x128xf32>
    %134 = tpu.matmul %128, %133, %cst_48 {dimension_numbers = #tpu.dot_dimension_numbers<[1], [0], [0], [1], [0, 0, 1, 1], [], []>} : vector<8x32xf32>, vector<32x128xf32>, vector<8x128xf32> -> vector<8x128xf32>
    %135 = arith.addf %132, %134 : vector<8x128xf32>
    %136 = math.tanh %135 : vector<8x128xf32>
    %137 = arith.mulf %136, %9 : vector<8x128xf32>
    %138 = arith.addf %137, %12 : vector<8x128xf32>
    %139 = vector.extract_strided_slice %138 {offsets = [0, 0], sizes = [8, 32], strides = [1, 1]} : vector<8x128xf32> to vector<8x32xf32>
    %140 = vector.extract_strided_slice %138 {offsets = [0, 32], sizes = [8, 32], strides = [1, 1]} : vector<8x128xf32> to vector<8x32xf32>
    %141 = vector.extract_strided_slice %138 {offsets = [0, 64], sizes = [8, 32], strides = [1, 1]} : vector<8x128xf32> to vector<8x32xf32>
    %142 = vector.extract_strided_slice %138 {offsets = [0, 96], sizes = [8, 32], strides = [1, 1]} : vector<8x128xf32> to vector<8x32xf32>
    %143 = arith.mulf %140, %126 : vector<8x32xf32>
    %144 = arith.mulf %139, %141 : vector<8x32xf32>
    %145 = arith.addf %143, %144 : vector<8x32xf32>
    %146 = math.tanh %145 : vector<8x32xf32>
    %147 = arith.mulf %142, %146 : vector<8x32xf32>
    %c7_i32 = arith.constant 7 : i32
    %c8_i32_49 = arith.constant 8 : i32
    %148 = arith.muli %c7_i32, %c8_i32_49 : i32
    %149 = tpu.assume_multiple %148, 8 : i32
    %150 = arith.index_cast %149 : i32 to index
    %c0_50 = arith.constant 0 : index
    %151 = vector.load %arg11[%150, %c0_50] : memref<64x128xf32, #tpu.memory_space<vmem>>, vector<8x128xf32>
    %c0_51 = arith.constant 0 : index
    %c0_52 = arith.constant 0 : index
    %152 = vector.load %arg2[%c0_51, %c0_52] : memref<32x128xf32, #tpu.memory_space<vmem>>, vector<32x128xf32>
    %cst_53 = arith.constant dense<0.000000e+00> : vector<8x128xf32>
    %153 = tpu.matmul %147, %152, %cst_53 {dimension_numbers = #tpu.dot_dimension_numbers<[1], [0], [0], [1], [0, 0, 1, 1], [], []>} : vector<8x32xf32>, vector<32x128xf32>, vector<8x128xf32> -> vector<8x128xf32>
    %154 = arith.addf %151, %153 : vector<8x128xf32>
    %155 = math.tanh %154 : vector<8x128xf32>
    %156 = arith.mulf %155, %9 : vector<8x128xf32>
    %157 = arith.addf %156, %12 : vector<8x128xf32>
    %158 = vector.extract_strided_slice %157 {offsets = [0, 0], sizes = [8, 32], strides = [1, 1]} : vector<8x128xf32> to vector<8x32xf32>
    %159 = vector.extract_strided_slice %157 {offsets = [0, 32], sizes = [8, 32], strides = [1, 1]} : vector<8x128xf32> to vector<8x32xf32>
    %160 = vector.extract_strided_slice %157 {offsets = [0, 64], sizes = [8, 32], strides = [1, 1]} : vector<8x128xf32> to vector<8x32xf32>
    %161 = vector.extract_strided_slice %157 {offsets = [0, 96], sizes = [8, 32], strides = [1, 1]} : vector<8x128xf32> to vector<8x32xf32>
    %162 = arith.mulf %159, %145 : vector<8x32xf32>
    %163 = arith.mulf %158, %160 : vector<8x32xf32>
    %164 = arith.addf %162, %163 : vector<8x32xf32>
    %165 = math.tanh %164 : vector<8x32xf32>
    %166 = arith.mulf %161, %165 : vector<8x32xf32>
    %c8_i32_54 = arith.constant 8 : i32
    %c0_55 = arith.constant 0 : index
    %c0_56 = arith.constant 0 : index
    %167 = vector.load %arg8[%c0_55, %c0_56] : memref<32x128xf32, #tpu.memory_space<vmem>>, vector<32x128xf32>
    %cst_57 = arith.constant dense<0.000000e+00> : vector<8x128xf32>
    %168 = tpu.matmul %166, %167, %cst_57 {dimension_numbers = #tpu.dot_dimension_numbers<[1], [0], [0], [1], [0, 0, 1, 1], [], []>} : vector<8x32xf32>, vector<32x128xf32>, vector<8x128xf32> -> vector<8x128xf32>
    %c0_58 = arith.constant 0 : index
    %c0_59 = arith.constant 0 : index
    %169 = vector.load %arg9[%c0_58, %c0_59] : memref<1x128xf32, #tpu.memory_space<vmem>>, vector<1x128xf32>
    %170 = vector.broadcast %169 : vector<1x128xf32> to vector<8x128xf32>
    %171 = arith.addf %168, %170 : vector<8x128xf32>
    %c0_60 = arith.constant 0 : index
    %c0_61 = arith.constant 0 : index
    %172 = vector.load %arg10[%c0_60, %c0_61] : memref<8x128xf32, #tpu.memory_space<vmem>>, vector<8x128xf32>
    tpu.vector_store %arg10[%c0_60, %c0_61], %171 {strides = array<i32>} : memref<8x128xf32, #tpu.memory_space<vmem>>, vector<8x128xf32>,
    return
  }
}

</mosaic_0001>

<llo_original>
// kernel: tpu_custom_call.1
$region0: #{tpu_custom_call.1}
  #allocation0 [shape = 'u32[]', space=smem, size = 0x4, offset = 0x4, fixed_abs, tag = 'smem constant byte address 0x4 - core index']
  #allocation1 [shape = 'u32[144,128]{1,0:T(1,128)}', space=vmem, size = 0x12000, scoped, tag = 'internal scratch']
  #allocation2 [shape = 'f32[64,128]{1,0:T(8,128)}', space=vmem, size = 0x8000, scoped, tag = 'scratch operand']
  %s0 = inlined_call_operand.vmem [shape: f32[64,16], index: 0, kind: input, shape index: {}]
  %s1 = inlined_call_operand.vmem [shape: f32[16,128], index: 1, kind: input, shape index: {}]
  %s2 = inlined_call_operand.vmem [shape: f32[32,128], index: 2, kind: input, shape index: {}]
  %s3 = inlined_call_operand.vmem [shape: f32[1,128], index: 3, kind: input, shape index: {}]
  %s4 = inlined_call_operand.vmem [shape: f32[1,128], index: 4, kind: input, shape index: {}]
  %s5 = inlined_call_operand.hbm [shape: f32[1,128], index: 5, kind: input, shape index: {}]
  %s6 = inlined_call_operand.vmem [shape: f32[8,32], index: 6, kind: input, shape index: {}]
  %s7 = inlined_call_operand.vmem [shape: f32[8,32], index: 7, kind: input, shape index: {}]
  %s8 = inlined_call_operand.vmem [shape: f32[32,128], index: 8, kind: input, shape index: {}]
  %s9 = inlined_call_operand.vmem [shape: f32[1,128], index: 9, kind: input, shape index: {}]
  %s10 = inlined_call_operand.hbm [shape: f32[8,128], index: 10, kind: output, shape index: {}]
  %s11 = sld [smem:[#allocation0]]
  $region54: #{tpu_custom_call.1} parent=0
    _
  %s13 = ssub.s32 1, %s11
  %s14 = scalar_select 0, %s13, %s11
  $region1: #{tpu_custom_call.1} parent=0
    #allocation3 [shape = 'u8[512]{0}', space=vmem, size = 0x400, scoped, tag = 'input window, operand 5, single buffered']
    #allocation4 [shape = 's32[1]{0}', space=sflag, size = 0x4, scoped, tag = 'scoped memory for tpu_custom_call.1']
    #allocation5 [shape = 's32[1]{0}', space=sflag, size = 0x4, scoped, tag = 'scoped memory for tpu_custom_call.1']
    #allocation6 [shape = 'u8[4096]{0}', space=vmem, size = 0x1000, scoped, tag = 'output window, operand 0, single buffered']
    %15 = vsyncpa [#allocation4], 0
    %16 = vsyncpa [#allocation5], 0
    // Predicated region
    $region2: #{tpu_custom_call.1} parent=1 // pred_check
      _
    $region3: #{tpu_custom_call.1} parent=1 // pred_check_branch
      %18 = sbr.rel (0) target = $region5
    $region4: #{tpu_custom_call.1} parent=1 // pred_region
      _
    $region5: #{tpu_custom_call.1} parent=1 // pred_fallthru
      _
    // Predicated region
    $region6: #{tpu_custom_call.1} parent=1 // pred_check
      _
    $region7: #{tpu_custom_call.1} parent=1 // pred_check_branch
      %20 = sbr.rel (0) target = $region9
    $region8: #{tpu_custom_call.1} parent=1 // pred_region
      _
    $region9: #{tpu_custom_call.1} parent=1 // pred_fallthru
      _
    // Predicated region
    $region10: #{tpu_custom_call.1} parent=1 // pred_check
      _
    $region11: #{tpu_custom_call.1} parent=1 // pred_check_branch
      %22 = sbr.rel (0) target = $region13
    $region12: #{tpu_custom_call.1} parent=1 // pred_region
      _
    $region13: #{tpu_custom_call.1} parent=1 // pred_fallthru
      _
    // Predicated region
    $region14: #{tpu_custom_call.1} parent=1 // pred_check
      _
    $region15: #{tpu_custom_call.1} parent=1 // pred_check_branch
      %24 = sbr.rel (0) target = $region17
    $region16: #{tpu_custom_call.1} parent=1 // pred_region
      _
    $region17: #{tpu_custom_call.1} parent=1 // pred_fallthru
      _
    // Predicated region
    $region18: #{tpu_custom_call.1} parent=1 // pred_check
      _
    $region19: #{tpu_custom_call.1} parent=1 // pred_check_branch
      %26 = sbr.rel (0) target = $region21
    $region20: #{tpu_custom_call.1} parent=1 // pred_region
      _
    $region21: #{tpu_custom_call.1} parent=1 // pred_fallthru
      _
    // Predicated region
    $region22: #{tpu_custom_call.1} parent=1 // pred_check
      _
    $region23: #{tpu_custom_call.1} parent=1 // pred_check_branch
      %28 = sbr.rel (0) target = $region25
    $region24: #{tpu_custom_call.1} parent=1 // pred_region
      %s30 = ssub.s32 16, 16
      %31 = vsyncadd [#allocation4], %s30
      %s33 = sshll.u32 [#allocation3], 4
      %s34 = int_to_ptr.vmem [resolvable:$true] %s33
      %36 = dma.hbm_to_vmem [thread:$0]  %s5, 16, %s34, [#allocation4]
    $region25: #{tpu_custom_call.1} parent=1 // pred_fallthru
      _
    // Predicated region
    $region26: #{tpu_custom_call.1} parent=1 // pred_check
      _
    $region27: #{tpu_custom_call.1} parent=1 // pred_check_branch
      %38 = sbr.rel (0) target = $region29
    $region28: #{tpu_custom_call.1} parent=1 // pred_region
      _
    $region29: #{tpu_custom_call.1} parent=1 // pred_fallthru
      _
    // Predicated region
    $region30: #{tpu_custom_call.1} parent=1 // pred_check
      _
    $region31: #{tpu_custom_call.1} parent=1 // pred_check_branch
      %40 = sbr.rel (0) target = $region33
    $region32: #{tpu_custom_call.1} parent=1 // pred_region
      _
    $region33: #{tpu_custom_call.1} parent=1 // pred_fallthru
      _
    // Predicated region
    $region34: #{tpu_custom_call.1} parent=1 // pred_check
      _
    $region35: #{tpu_custom_call.1} parent=1 // pred_check_branch
      %42 = sbr.rel (0) target = $region37
    $region36: #{tpu_custom_call.1} parent=1 // pred_region
      _
    $region37: #{tpu_custom_call.1} parent=1 // pred_fallthru
      _
    // Predicated region
    $region38: #{tpu_custom_call.1} parent=1 // pred_check
      _
    $region39: #{tpu_custom_call.1} parent=1 // pred_check_branch
      %44 = sbr.rel (0) target = $region41
    $region40: #{tpu_custom_call.1} parent=1 // pred_region
      _
    $region41: #{tpu_custom_call.1} parent=1 // pred_fallthru
      _
    // Predicated region
    $region42: #{tpu_custom_call.1} parent=1 // pred_check
      _
    $region43: #{tpu_custom_call.1} parent=1 // pred_check_branch
      %46 = sbr.rel (0) target = $region45
    $region44: #{tpu_custom_call.1} parent=1 // pred_region
      %47 = dma.done [#allocation4], 16
    $region45: #{tpu_custom_call.1} parent=1 // pred_fallthru
      _
    %v48 = vld [vmem:[%s0] sm:$0xff]
    %v49 = vld [vmem:[%s0 + $0x8] sm:$0xff]
    %v50 = vld [vmem:[%s0 + $0x10] sm:$0xff]
    %v51 = vld [vmem:[%s0 + $0x18] sm:$0xff]
    %v52 = vld [vmem:[%s0 + $0x20] sm:$0xff]
    %v53 = vld [vmem:[%s0 + $0x28] sm:$0xff]
    %v54 = vld [vmem:[%s0 + $0x30] sm:$0xff]
    %v55 = vld [vmem:[%s0 + $0x38] sm:$0xff]
    %v56 = vld [vmem:[%s1] sm:$0xff]
    %v57 = vld [vmem:[%s1 + $0x8] sm:$0xff]
    %v58 = vld [vmem:[%s3] sm:$0x1]
    %v60 = vlaneseq
    %v61 = vshrl.u32 %v60, 7
    %v62 = vsub.s32 0, %v61
    %v63 = vrot.slane %v58, %v62
    %vm65 = vcmask 130048
    %v67 = vsel %vm65, %v48, 0
    %v70 = vsel %vm65, %v49, 0
    %v73 = vsel %vm65, %v50, 0
    %v76 = vsel %vm65, %v51, 0
    %v79 = vsel %vm65, %v52, 0
    %v82 = vsel %vm65, %v53, 0
    %v85 = vsel %vm65, %v54, 0
    %v88 = vsel %vm65, %v55, 0
    %90 = vmatprep.subr.mxu0 0.0
    %91 = vmatpush1.msra.mxu0 %v56
    %92 = vmatprep.subr.mxu0 0.0
    %93 = vmatpush1.msra.mxu0 %v57
    %94 = vmatprep.subr.mxu0 0.0
    %95 = vmatpush1.msra.mxu0 0.0
    %96 = vmatprep.subr.mxu0 0.0
    %97 = vmatpush1.msra.mxu0 0.0
    %98 = vmatprep.subr.mxu0 0.0
    %99 = vmatpush1.msra.mxu0 0.0
    %100 = vmatprep.subr.mxu0 0.0
    %101 = vmatpush1.msra.mxu0 0.0
    %102 = vmatprep.subr.mxu0 0.0
    %103 = vmatpush1.msra.mxu0 0.0
    %104 = vmatprep.subr.mxu0 0.0
    %105 = vmatpush1.msra.mxu0 0.0
    %106 = vmatprep.subr.mxu0 0.0
    %107 = vmatpush1.msra.mxu0 0.0
    %108 = vmatprep.subr.mxu0 0.0
    %109 = vmatpush1.msra.mxu0 0.0
    %110 = vmatprep.subr.mxu0 0.0
    %111 = vmatpush1.msra.mxu0 0.0
    %112 = vmatprep.subr.mxu0 0.0
    %113 = vmatpush1.msra.mxu0 0.0
    %114 = vmatprep.subr.mxu0 0.0
    %115 = vmatpush1.msra.mxu0 0.0
    %116 = vmatprep.subr.mxu0 0.0
    %117 = vmatpush1.msra.mxu0 0.0
    %118 = vmatprep.subr.mxu0 0.0
    %119 = vmatpush1.msra.mxu0 0.0
    %120 = vmatprep.subr.mxu0 0.0
    %121 = vmatpush1.msra.mxu0 0.0
    %122 = vmatprep.subr.mxu0 0.0
    %123 = vmatpush1.msra.mxu0 0.0
    %124 = vmatprep.subr.mxu0 0.0
    %125 = vmatpush1.msra.mxu0 0.0
    %126 = vmatprep.subr.mxu0 0.0
    %127 = vmatpush1.msra.mxu0 0.0
    %128 = vmatprep.subr.mxu0 0.0
    %129 = vmatpush1.msra.mxu0 0.0
    %130 = vmatprep.subr.mxu0 0.0
    %131 = vmatpush1.msra.mxu0 0.0
    %132 = vmatprep.subr.mxu0 0.0
    %133 = vmatpush1.msra.mxu0 0.0
    %134 = vmatprep.subr.mxu0 0.0
    %135 = vmatpush1.msra.mxu0 0.0
    %136 = vmatprep.subr.mxu0 0.0
    %137 = vmatpush1.msra.mxu0 0.0
    %138 = vmatprep.subr.mxu0 0.0
    %139 = vmatpush1.msra.mxu0 0.0
    %140 = vmatprep.subr.mxu0 0.0
    %141 = vmatpush1.msra.mxu0 0.0
    %142 = vmatprep.subr.mxu0 0.0
    %143 = vmatpush1.msra.mxu0 0.0
    %144 = vmatprep.subr.mxu0 0.0
    %145 = vmatpush1.msra.mxu0 0.0
    %146 = vmatprep.subr.mxu0 0.0
    %147 = vmatpush1.msra.mxu0 0.0
    %148 = vmatprep.subr.mxu0 0.0
    %149 = vmatpush1.msra.mxu0 0.0
    %150 = vmatprep.subr.mxu0 0.0
    %151 = vmatpush1.msra.mxu0 0.0
    %152 = vmatprep.subr.mxu0 0.0
    %153 = vmatpush1.msra.mxu0 0.0
    %154 = vmatprep.mubr.f32.mxu0 0.0
    %155 = vmatmul.mubr.f32.gmra.mrb[0].mxu0 %v67
    %v156 = vpop.f32.mrb[0].mxu0
    %v157 = vadd.f32 %v63, %v156
    %v158 = vpop.f32.mrb[0].mxu0
    %159 = vmatprep.mubr.f32.mxu0 0.0
    %160 = vmatmul.mubr.f32.gmra.mrb[0].mxu0 %v70
    %v161 = vpop.f32.mrb[0].mxu0
    %v162 = vadd.f32 %v63, %v161
    %v163 = vpop.f32.mrb[0].mxu0
    %164 = vmatprep.mubr.f32.mxu0 0.0
    %165 = vmatmul.mubr.f32.gmra.mrb[0].mxu0 %v73
    %v166 = vpop.f32.mrb[0].mxu0
    %v167 = vadd.f32 %v63, %v166
    %v168 = vpop.f32.mrb[0].mxu0
    %169 = vmatprep.mubr.f32.mxu0 0.0
    %170 = vmatmul.mubr.f32.gmra.mrb[0].mxu0 %v76
    %v171 = vpop.f32.mrb[0].mxu0
    %v172 = vadd.f32 %v63, %v171
    %v173 = vpop.f32.mrb[0].mxu0
    %174 = vmatprep.mubr.f32.mxu0 0.0
    %175 = vmatmul.mubr.f32.gmra.mrb[0].mxu0 %v79
    %v176 = vpop.f32.mrb[0].mxu0
    %v177 = vadd.f32 %v63, %v176
    %v178 = vpop.f32.mrb[0].mxu0
    %179 = vmatprep.mubr.f32.mxu0 0.0
    %180 = vmatmul.mubr.f32.gmra.mrb[0].mxu0 %v82
    %v181 = vpop.f32.mrb[0].mxu0
    %v182 = vadd.f32 %v63, %v181
    %v183 = vpop.f32.mrb[0].mxu0
    %184 = vmatprep.mubr.f32.mxu0 0.0
    %185 = vmatmul.mubr.f32.gmra.mrb[0].mxu0 %v85
    %v186 = vpop.f32.mrb[0].mxu0
    %v187 = vadd.f32 %v63, %v186
    %v188 = vpop.f32.mrb[0].mxu0
    %189 = vmatprep.mubr.f32.mxu0 0.0
    %190 = vmatmul.mubr.f32.gmra.mrb[0].mxu0 %v88
    %v191 = vpop.f32.mrb[0].mxu0
    %v192 = vadd.f32 %v63, %v191
    %v193 = vpop.f32.mrb[0].mxu0
    %194 = vdwg.mxu0
    %195 = vst [vmem:[#allocation2] sm:$0xff] %v157
    %196 = vst [vmem:[#allocation2 + $0x8] sm:$0xff] %v162
    %197 = vst [vmem:[#allocation2 + $0x10] sm:$0xff] %v167
    %198 = vst [vmem:[#allocation2 + $0x18] sm:$0xff] %v172
    %199 = vst [vmem:[#allocation2 + $0x20] sm:$0xff] %v177
    %200 = vst [vmem:[#allocation2 + $0x28] sm:$0xff] %v182
    %201 = vst [vmem:[#allocation2 + $0x30] sm:$0xff] %v187
    %202 = vst [vmem:[#allocation2 + $0x38] sm:$0xff] %v192
    %v203 = vld [vmem:[%s4] sm:$0x1]
    %v205 = vlaneseq
    %v206 = vshrl.u32 %v205, 7
    %v207 = vsub.s32 0, %v206
    %v208 = vrot.slane %v203, %v207
    %v210 = vld [vmem:[#allocation3] sm:$0x1]
    %v212 = vlaneseq
    %v213 = vshrl.u32 %v212, 7
    %v214 = vsub.s32 0, %v213
    %v215 = vrot.slane %v210, %v214
    %v217 = vld [vmem:[%s6] sm:$0xff]
    %v218 = vld [vmem:[%s7] sm:$0xff]
    %v219 = vld [vmem:[#allocation2] sm:$0xff]
    %v220 = vld [vmem:[%s2] sm:$0xff]
    %v221 = vld [vmem:[%s2 + $0x8] sm:$0xff]
    %v222 = vld [vmem:[%s2 + $0x10] sm:$0xff]
    %v223 = vld [vmem:[%s2 + $0x18] sm:$0xff]
    %vm224 = vcmask 261120
    %v226 = vsel %vm224, %v217, 0
    %228 = vmatprep.subr.mxu0 0.0
    %229 = vmatpush1.msra.mxu0 %v220
    %230 = vmatprep.subr.mxu0 0.0
    %231 = vmatpush1.msra.mxu0 %v221
    %232 = vmatprep.subr.mxu0 0.0
    %233 = vmatpush1.msra.mxu0 %v222
    %234 = vmatprep.subr.mxu0 0.0
    %235 = vmatpush1.msra.mxu0 %v223
    %236 = vmatprep.subr.mxu0 0.0
    %237 = vmatpush1.msra.mxu0 0.0
    %238 = vmatprep.subr.mxu0 0.0
    %239 = vmatpush1.msra.mxu0 0.0
    %240 = vmatprep.subr.mxu0 0.0
    %241 = vmatpush1.msra.mxu0 0.0
    %242 = vmatprep.subr.mxu0 0.0
    %243 = vmatpush1.msra.mxu0 0.0
    %244 = vmatprep.subr.mxu0 0.0
    %245 = vmatpush1.msra.mxu0 0.0
    %246 = vmatprep.subr.mxu0 0.0
    %247 = vmatpush1.msra.mxu0 0.0
    %248 = vmatprep.subr.mxu0 0.0
    %249 = vmatpush1.msra.mxu0 0.0
    %250 = vmatprep.subr.mxu0 0.0
    %251 = vmatpush1.msra.mxu0 0.0
    %252 = vmatprep.subr.mxu0 0.0
    %253 = vmatpush1.msra.mxu0 0.0
    %254 = vmatprep.subr.mxu0 0.0
    %255 = vmatpush1.msra.mxu0 0.0
    %256 = vmatprep.subr.mxu0 0.0
    %257 = vmatpush1.msra.mxu0 0.0
    %258 = vmatprep.subr.mxu0 0.0
    %259 = vmatpush1.msra.mxu0 0.0
    %260 = vmatprep.subr.mxu0 0.0
    %261 = vmatpush1.msra.mxu0 0.0
    %262 = vmatprep.subr.mxu0 0.0
    %263 = vmatpush1.msra.mxu0 0.0
    %264 = vmatprep.subr.mxu0 0.0
    %265 = vmatpush1.msra.mxu0 0.0
    %266 = vmatprep.subr.mxu0 0.0
    %267 = vmatpush1.msra.mxu0 0.0
    %268 = vmatprep.subr.mxu0 0.0
    %269 = vmatpush1.msra.mxu0 0.0
    %270 = vmatprep.subr.mxu0 0.0
    %271 = vmatpush1.msra.mxu0 0.0
    %272 = vmatprep.subr.mxu0 0.0
    %273 = vmatpush1.msra.mxu0 0.0
    %274 = vmatprep.subr.mxu0 0.0
    %275 = vmatpush1.msra.mxu0 0.0
    %276 = vmatprep.subr.mxu0 0.0
    %277 = vmatpush1.msra.mxu0 0.0
    %278 = vmatprep.subr.mxu0 0.0
    %279 = vmatpush1.msra.mxu0 0.0
    %280 = vmatprep.subr.mxu0 0.0
    %281 = vmatpush1.msra.mxu0 0.0
    %282 = vmatprep.subr.mxu0 0.0
    %283 = vmatpush1.msra.mxu0 0.0
    %284 = vmatprep.subr.mxu0 0.0
    %285 = vmatpush1.msra.mxu0 0.0
    %286 = vmatprep.subr.mxu0 0.0
    %287 = vmatpush1.msra.mxu0 0.0
    %288 = vmatprep.subr.mxu0 0.0
    %289 = vmatpush1.msra.mxu0 0.0
    %290 = vmatprep.subr.mxu0 0.0
    %291 = vmatpush1.msra.mxu0 0.0
    %292 = vmatprep.mubr.f32.mxu0 0.0
    %293 = vmatmul.mubr.f32.gmra.mrb[0].mxu0 %v226
    %v294 = vpop.f32.mrb[0].mxu0
    %v295 = vadd.f32 0.0, %v294
    %v296 = vpop.f32.mrb[0].mxu0
    %297 = vdwg.mxu0
    %v298 = vadd.f32 %v219, %v295
    %v299 = vtanh.pop %v298
    %v300 = vmul.f32 %v299, %v208
    %v301 = vadd.f32 %v300, %v215
    %303 = vrot.lane.b32.xlu0 %v218, 32
    %v304 = vpop.permute.xlu0 %303
    %v306 = vmul.f32 %v301, %v304
    %308 = vrot.lane.b32.xlu0 %v301, 64
    %v309 = vpop.permute.xlu0 %308
    %v311 = vmul.f32 %v301, %v309
    %313 = vrot.lane.b32.xlu0 %v311, 32
    %v314 = vpop.permute.xlu0 %313
    %v316 = vadd.f32 %v306, %v314
    %v317 = vtanh.pop %v316
    %319 = vrot.lane.b32.xlu0 %v317, 64
    %v320 = vpop.permute.xlu0 %319
    %v322 = vmul.f32 %v301, %v320
    %s323 = scalar_lea.vmem [#allocation2], 8
    %v324 = vld [vmem:[%s323] sm:$0xff]
    %326 = vrot.lane.b32.xlu0 %v322, 32
    %v327 = vpop.permute.xlu0 %326
    %v328 = vsel %vm224, %v327, 0
    %330 = vmatprep.subr.mxu0 0.0
    %331 = vmatpush1.msra.mxu0 %v220
    %332 = vmatprep.subr.mxu0 0.0
    %333 = vmatpush1.msra.mxu0 %v221
    %334 = vmatprep.subr.mxu0 0.0
    %335 = vmatpush1.msra.mxu0 %v222
    %336 = vmatprep.subr.mxu0 0.0
    %337 = vmatpush1.msra.mxu0 %v223
    %338 = vmatprep.subr.mxu0 0.0
    %339 = vmatpush1.msra.mxu0 0.0
    %340 = vmatprep.subr.mxu0 0.0
    %341 = vmatpush1.msra.mxu0 0.0
    %342 = vmatprep.subr.mxu0 0.0
    %343 = vmatpush1.msra.mxu0 0.0
    %344 = vmatprep.subr.mxu0 0.0
    %345 = vmatpush1.msra.mxu0 0.0
    %346 = vmatprep.subr.mxu0 0.0
    %347 = vmatpush1.msra.mxu0 0.0
    %348 = vmatprep.subr.mxu0 0.0
    %349 = vmatpush1.msra.mxu0 0.0
    %350 = vmatprep.subr.mxu0 0.0
    %351 = vmatpush1.msra.mxu0 0.0
    %352 = vmatprep.subr.mxu0 0.0
    %353 = vmatpush1.msra.mxu0 0.0
    %354 = vmatprep.subr.mxu0 0.0
    %355 = vmatpush1.msra.mxu0 0.0
    %356 = vmatprep.subr.mxu0 0.0
    %357 = vmatpush1.msra.mxu0 0.0
    %358 = vmatprep.subr.mxu0 0.0
    %359 = vmatpush1.msra.mxu0 0.0
    %360 = vmatprep.subr.mxu0 0.0
    %361 = vmatpush1.msra.mxu0 0.0
    %362 = vmatprep.subr.mxu0 0.0
    %363 = vmatpush1.msra.mxu0 0.0
    %364 = vmatprep.subr.mxu0 0.0
    %365 = vmatpush1.msra.mxu0 0.0
    %366 = vmatprep.subr.mxu0 0.0
    %367 = vmatpush1.msra.mxu0 0.0
    %368 = vmatprep.subr.mxu0 0.0
    %369 = vmatpush1.msra.mxu0 0.0
    %370 = vmatprep.subr.mxu0 0.0
    %371 = vmatpush1.msra.mxu0 0.0
    %372 = vmatprep.subr.mxu0 0.0
    %373 = vmatpush1.msra.mxu0 0.0
    %374 = vmatprep.subr.mxu0 0.0
    %375 = vmatpush1.msra.mxu0 0.0
    %376 = vmatprep.subr.mxu0 0.0
    %377 = vmatpush1.msra.mxu0 0.0
    %378 = vmatprep.subr.mxu0 0.0
    %379 = vmatpush1.msra.mxu0 0.0
    %380 = vmatprep.subr.mxu0 0.0
    %381 = vmatpush1.msra.mxu0 0.0
    %382 = vmatprep.subr.mxu0 0.0
    %383 = vmatpush1.msra.mxu0 0.0
    %384 = vmatprep.subr.mxu0 0.0
    %385 = vmatpush1.msra.mxu0 0.0
    %386 = vmatprep.subr.mxu0 0.0
    %387 = vmatpush1.msra.mxu0 0.0
    %388 = vmatprep.subr.mxu0 0.0
    %389 = vmatpush1.msra.mxu0 0.0
    %390 = vmatprep.subr.mxu0 0.0
    %391 = vmatpush1.msra.mxu0 0.0
    %392 = vmatprep.subr.mxu0 0.0
    %393 = vmatpush1.msra.mxu0 0.0
    %394 = vmatprep.mubr.f32.mxu0 0.0
    %395 = vmatmul.mubr.f32.gmra.mrb[0].mxu0 %v328
    %v396 = vpop.f32.mrb[0].mxu0
    %v397 = vadd.f32 0.0, %v396
    %v398 = vpop.f32.mrb[0].mxu0
    %399 = vdwg.mxu0
    %v400 = vadd.f32 %v324, %v397
    %v401 = vtanh.pop %v400
    %v402 = vmul.f32 %v401, %v208
    %v403 = vadd.f32 %v402, %v215
    %v404 = vmul.f32 %v403, %v316
    %406 = vrot.lane.b32.xlu0 %v403, 64
    %v407 = vpop.permute.xlu0 %406
    %v409 = vmul.f32 %v403, %v407
    %411 = vrot.lane.b32.xlu0 %v409, 32
    %v412 = vpop.permute.xlu0 %411
    %v414 = vadd.f32 %v404, %v412
    %v415 = vtanh.pop %v414
    %417 = vrot.lane.b32.xlu0 %v415, 64
    %v418 = vpop.permute.xlu0 %417
    %v420 = vmul.f32 %v403, %v418
    %s421 = scalar_lea.vmem [#allocation2], 16
    %v422 = vld [vmem:[%s421] sm:$0xff]
    %424 = vrot.lane.b32.xlu0 %v420, 32
    %v425 = vpop.permute.xlu0 %424
    %v426 = vsel %vm224, %v425, 0
    %428 = vmatprep.subr.mxu0 0.0
    %429 = vmatpush1.msra.mxu0 %v220
    %430 = vmatprep.subr.mxu0 0.0
    %431 = vmatpush1.msra.mxu0 %v221
    %432 = vmatprep.subr.mxu0 0.0
    %433 = vmatpush1.msra.mxu0 %v222
    %434 = vmatprep.subr.mxu0 0.0
    %435 = vmatpush1.msra.mxu0 %v223
    %436 = vmatprep.subr.mxu0 0.0
    %437 = vmatpush1.msra.mxu0 0.0
    %438 = vmatprep.subr.mxu0 0.0
    %439 = vmatpush1.msra.mxu0 0.0
    %440 = vmatprep.subr.mxu0 0.0
    %441 = vmatpush1.msra.mxu0 0.0
    %442 = vmatprep.subr.mxu0 0.0
    %443 = vmatpush1.msra.mxu0 0.0
    %444 = vmatprep.subr.mxu0 0.0
    %445 = vmatpush1.msra.mxu0 0.0
    %446 = vmatprep.subr.mxu0 0.0
    %447 = vmatpush1.msra.mxu0 0.0
    %448 = vmatprep.subr.mxu0 0.0
    %449 = vmatpush1.msra.mxu0 0.0
    %450 = vmatprep.subr.mxu0 0.0
    %451 = vmatpush1.msra.mxu0 0.0
    %452 = vmatprep.subr.mxu0 0.0
    %453 = vmatpush1.msra.mxu0 0.0
    %454 = vmatprep.subr.mxu0 0.0
    %455 = vmatpush1.msra.mxu0 0.0
    %456 = vmatprep.subr.mxu0 0.0
    %457 = vmatpush1.msra.mxu0 0.0
    %458 = vmatprep.subr.mxu0 0.0
    %459 = vmatpush1.msra.mxu0 0.0
    %460 = vmatprep.subr.mxu0 0.0
    %461 = vmatpush1.msra.mxu0 0.0
    %462 = vmatprep.subr.mxu0 0.0
    %463 = vmatpush1.msra.mxu0 0.0
    %464 = vmatprep.subr.mxu0 0.0
    %465 = vmatpush1.msra.mxu0 0.0
    %466 = vmatprep.subr.mxu0 0.0
    %467 = vmatpush1.msra.mxu0 0.0
    %468 = vmatprep.subr.mxu0 0.0
    %469 = vmatpush1.msra.mxu0 0.0
    %470 = vmatprep.subr.mxu0 0.0
    %471 = vmatpush1.msra.mxu0 0.0
    %472 = vmatprep.subr.mxu0 0.0
    %473 = vmatpush1.msra.mxu0 0.0
    %474 = vmatprep.subr.mxu0 0.0
    %475 = vmatpush1.msra.mxu0 0.0
    %476 = vmatprep.subr.mxu0 0.0
    %477 = vmatpush1.msra.mxu0 0.0
    %478 = vmatprep.subr.mxu0 0.0
    %479 = vmatpush1.msra.mxu0 0.0
    %480 = vmatprep.subr.mxu0 0.0
    %481 = vmatpush1.msra.mxu0 0.0
    %482 = vmatprep.subr.mxu0 0.0
    %483 = vmatpush1.msra.mxu0 0.0
    %484 = vmatprep.subr.mxu0 0.0
    %485 = vmatpush1.msra.mxu0 0.0
    %486 = vmatprep.subr.mxu0 0.0
    %487 = vmatpush1.msra.mxu0 0.0
    %488 = vmatprep.subr.mxu0 0.0
    %489 = vmatpush1.msra.mxu0 0.0
    %490 = vmatprep.subr.mxu0 0.0
    %491 = vmatpush1.msra.mxu0 0.0
    %492 = vmatprep.mubr.f32.mxu0 0.0
    %493 = vmatmul.mubr.f32.gmra.mrb[0].mxu0 %v426
    %v494 = vpop.f32.mrb[0].mxu0
    %v495 = vadd.f32 0.0, %v494
    %v496 = vpop.f32.mrb[0].mxu0
    %497 = vdwg.mxu0
    %v498 = vadd.f32 %v422, %v495
    %v499 = vtanh.pop %v498
    %v500 = vmul.f32 %v499, %v208
    %v501 = vadd.f32 %v500, %v215
    %v502 = vmul.f32 %v501, %v414
    %504 = vrot.lane.b32.xlu0 %v501, 64
    %v505 = vpop.permute.xlu0 %504
    %v507 = vmul.f32 %v501, %v505
    %509 = vrot.lane.b32.xlu0 %v507, 32
    %v510 = vpop.permute.xlu0 %509
    %v512 = vadd.f32 %v502, %v510
    %v513 = vtanh.pop %v512
    %515 = vrot.lane.b32.xlu0 %v513, 64
    %v516 = vpop.permute.xlu0 %515
    %v518 = vmul.f32 %v501, %v516
    %s519 = scalar_lea.vmem [#allocation2], 24
    %v520 = vld [vmem:[%s519] sm:$0xff]
    %522 = vrot.lane.b32.xlu0 %v518, 32
    %v523 = vpop.permute.xlu0 %522
    %v524 = vsel %vm224, %v523, 0
    %526 = vmatprep.subr.mxu0 0.0
    %527 = vmatpush1.msra.mxu0 %v220
    %528 = vmatprep.subr.mxu0 0.0
    %529 = vmatpush1.msra.mxu0 %v221
    %530 = vmatprep.subr.mxu0 0.0
    %531 = vmatpush1.msra.mxu0 %v222
    %532 = vmatprep.subr.mxu0 0.0
    %533 = vmatpush1.msra.mxu0 %v223
    %534 = vmatprep.subr.mxu0 0.0
    %535 = vmatpush1.msra.mxu0 0.0
    %536 = vmatprep.subr.mxu0 0.0
    %537 = vmatpush1.msra.mxu0 0.0
    %538 = vmatprep.subr.mxu0 0.0
    %539 = vmatpush1.msra.mxu0 0.0
    %540 = vmatprep.subr.mxu0 0.0
    %541 = vmatpush1.msra.mxu0 0.0
    %542 = vmatprep.subr.mxu0 0.0
    %543 = vmatpush1.msra.mxu0 0.0
    %544 = vmatprep.subr.mxu0 0.0
    %545 = vmatpush1.msra.mxu0 0.0
    %546 = vmatprep.subr.mxu0 0.0
    %547 = vmatpush1.msra.mxu0 0.0
    %548 = vmatprep.subr.mxu0 0.0
    %549 = vmatpush1.msra.mxu0 0.0
    %550 = vmatprep.subr.mxu0 0.0
    %551 = vmatpush1.msra.mxu0 0.0
    %552 = vmatprep.subr.mxu0 0.0
    %553 = vmatpush1.msra.mxu0 0.0
    %554 = vmatprep.subr.mxu0 0.0
    %555 = vmatpush1.msra.mxu0 0.0
    %556 = vmatprep.subr.mxu0 0.0
    %557 = vmatpush1.msra.mxu0 0.0
    %558 = vmatprep.subr.mxu0 0.0
    %559 = vmatpush1.msra.mxu0 0.0
    %560 = vmatprep.subr.mxu0 0.0
    %561 = vmatpush1.msra.mxu0 0.0
    %562 = vmatprep.subr.mxu0 0.0
    %563 = vmatpush1.msra.mxu0 0.0
    %564 = vmatprep.subr.mxu0 0.0
    %565 = vmatpush1.msra.mxu0 0.0
    %566 = vmatprep.subr.mxu0 0.0
    %567 = vmatpush1.msra.mxu0 0.0
    %568 = vmatprep.subr.mxu0 0.0
    %569 = vmatpush1.msra.mxu0 0.0
    %570 = vmatprep.subr.mxu0 0.0
    %571 = vmatpush1.msra.mxu0 0.0
    %572 = vmatprep.subr.mxu0 0.0
    %573 = vmatpush1.msra.mxu0 0.0
    %574 = vmatprep.subr.mxu0 0.0
    %575 = vmatpush1.msra.mxu0 0.0
    %576 = vmatprep.subr.mxu0 0.0
    %577 = vmatpush1.msra.mxu0 0.0
    %578 = vmatprep.subr.mxu0 0.0
    %579 = vmatpush1.msra.mxu0 0.0
    %580 = vmatprep.subr.mxu0 0.0
    %581 = vmatpush1.msra.mxu0 0.0
    %582 = vmatprep.subr.mxu0 0.0
    %583 = vmatpush1.msra.mxu0 0.0
    %584 = vmatprep.subr.mxu0 0.0
    %585 = vmatpush1.msra.mxu0 0.0
    %586 = vmatprep.subr.mxu0 0.0
    %587 = vmatpush1.msra.mxu0 0.0
    %588 = vmatprep.subr.mxu0 0.0
    %589 = vmatpush1.msra.mxu0 0.0
    %590 = vmatprep.mubr.f32.mxu0 0.0
    %591 = vmatmul.mubr.f32.gmra.mrb[0].mxu0 %v524
    %v592 = vpop.f32.mrb[0].mxu0
    %v593 = vadd.f32 0.0, %v592
    %v594 = vpop.f32.mrb[0].mxu0
    %595 = vdwg.mxu0
    %v596 = vadd.f32 %v520, %v593
    %v597 = vtanh.pop %v596
    %v598 = vmul.f32 %v597, %v208
    %v599 = vadd.f32 %v598, %v215
    %v600 = vmul.f32 %v599, %v512
    %602 = vrot.lane.b32.xlu0 %v599, 64
    %v603 = vpop.permute.xlu0 %602
    %v605 = vmul.f32 %v599, %v603
    %607 = vrot.lane.b32.xlu0 %v605, 32
    %v608 = vpop.permute.xlu0 %607
    %v610 = vadd.f32 %v600, %v608
    %v611 = vtanh.pop %v610
    %613 = vrot.lane.b32.xlu0 %v611, 64
    %v614 = vpop.permute.xlu0 %613
    %v616 = vmul.f32 %v599, %v614
    %s617 = scalar_lea.vmem [#allocation2], 32
    %v618 = vld [vmem:[%s617] sm:$0xff]
    %620 = vrot.lane.b32.xlu0 %v616, 32
    %v621 = vpop.permute.xlu0 %620
    %v622 = vsel %vm224, %v621, 0
    %624 = vmatprep.subr.mxu0 0.0
    %625 = vmatpush1.msra.mxu0 %v220
    %626 = vmatprep.subr.mxu0 0.0
    %627 = vmatpush1.msra.mxu0 %v221
    %628 = vmatprep.subr.mxu0 0.0
    %629 = vmatpush1.msra.mxu0 %v222
    %630 = vmatprep.subr.mxu0 0.0
    %631 = vmatpush1.msra.mxu0 %v223
    %632 = vmatprep.subr.mxu0 0.0
    %633 = vmatpush1.msra.mxu0 0.0
    %634 = vmatprep.subr.mxu0 0.0
    %635 = vmatpush1.msra.mxu0 0.0
    %636 = vmatprep.subr.mxu0 0.0
    %637 = vmatpush1.msra.mxu0 0.0
    %638 = vmatprep.subr.mxu0 0.0
    %639 = vmatpush1.msra.mxu0 0.0
    %640 = vmatprep.subr.mxu0 0.0
    %641 = vmatpush1.msra.mxu0 0.0
    %642 = vmatprep.subr.mxu0 0.0
    %643 = vmatpush1.msra.mxu0 0.0
    %644 = vmatprep.subr.mxu0 0.0
    %645 = vmatpush1.msra.mxu0 0.0
    %646 = vmatprep.subr.mxu0 0.0
    %647 = vmatpush1.msra.mxu0 0.0
    %648 = vmatprep.subr.mxu0 0.0
    %649 = vmatpush1.msra.mxu0 0.0
    %650 = vmatprep.subr.mxu0 0.0
    %651 = vmatpush1.msra.mxu0 0.0
    %652 = vmatprep.subr.mxu0 0.0
    %653 = vmatpush1.msra.mxu0 0.0
    %654 = vmatprep.subr.mxu0 0.0
    %655 = vmatpush1.msra.mxu0 0.0
    %656 = vmatprep.subr.mxu0 0.0
    %657 = vmatpush1.msra.mxu0 0.0
    %658 = vmatprep.subr.mxu0 0.0
    %659 = vmatpush1.msra.mxu0 0.0
    %660 = vmatprep.subr.mxu0 0.0
    %661 = vmatpush1.msra.mxu0 0.0
    %662 = vmatprep.subr.mxu0 0.0
    %663 = vmatpush1.msra.mxu0 0.0
    %664 = vmatprep.subr.mxu0 0.0
    %665 = vmatpush1.msra.mxu0 0.0
    %666 = vmatprep.subr.mxu0 0.0
    %667 = vmatpush1.msra.mxu0 0.0
    %668 = vmatprep.subr.mxu0 0.0
    %669 = vmatpush1.msra.mxu0 0.0
    %670 = vmatprep.subr.mxu0 0.0
    %671 = vmatpush1.msra.mxu0 0.0
    %672 = vmatprep.subr.mxu0 0.0
    %673 = vmatpush1.msra.mxu0 0.0
    %674 = vmatprep.subr.mxu0 0.0
    %675 = vmatpush1.msra.mxu0 0.0
    %676 = vmatprep.subr.mxu0 0.0
    %677 = vmatpush1.msra.mxu0 0.0
    %678 = vmatprep.subr.mxu0 0.0
    %679 = vmatpush1.msra.mxu0 0.0
    %680 = vmatprep.subr.mxu0 0.0
    %681 = vmatpush1.msra.mxu0 0.0
    %682 = vmatprep.subr.mxu0 0.0
    %683 = vmatpush1.msra.mxu0 0.0
    %684 = vmatprep.subr.mxu0 0.0
    %685 = vmatpush1.msra.mxu0 0.0
    %686 = vmatprep.subr.mxu0 0.0
    %687 = vmatpush1.msra.mxu0 0.0
    %688 = vmatprep.mubr.f32.mxu0 0.0
    %689 = vmatmul.mubr.f32.gmra.mrb[0].mxu0 %v622
    %v690 = vpop.f32.mrb[0].mxu0
    %v691 = vadd.f32 0.0, %v690
    %v692 = vpop.f32.mrb[0].mxu0
    %693 = vdwg.mxu0
    %v694 = vadd.f32 %v618, %v691
    %v695 = vtanh.pop %v694
    %v696 = vmul.f32 %v695, %v208
    %v697 = vadd.f32 %v696, %v215
    %v698 = vmul.f32 %v697, %v610
    %700 = vrot.lane.b32.xlu0 %v697, 64
    %v701 = vpop.permute.xlu0 %700
    %v703 = vmul.f32 %v697, %v701
    %705 = vrot.lane.b32.xlu0 %v703, 32
    %v706 = vpop.permute.xlu0 %705
    %v708 = vadd.f32 %v698, %v706
    %v709 = vtanh.pop %v708
    %711 = vrot.lane.b32.xlu0 %v709, 64
    %v712 = vpop.permute.xlu0 %711
    %v714 = vmul.f32 %v697, %v712
    %s715 = scalar_lea.vmem [#allocation2], 40
    %v716 = vld [vmem:[%s715] sm:$0xff]
    %718 = vrot.lane.b32.xlu0 %v714, 32
    %v719 = vpop.permute.xlu0 %718
    %v720 = vsel %vm224, %v719, 0
    %722 = vmatprep.subr.mxu0 0.0
    %723 = vmatpush1.msra.mxu0 %v220
    %724 = vmatprep.subr.mxu0 0.0
    %725 = vmatpush1.msra.mxu0 %v221
    %726 = vmatprep.subr.mxu0 0.0
    %727 = vmatpush1.msra.mxu0 %v222
    %728 = vmatprep.subr.mxu0 0.0
    %729 = vmatpush1.msra.mxu0 %v223
    %730 = vmatprep.subr.mxu0 0.0
    %731 = vmatpush1.msra.mxu0 0.0
    %732 = vmatprep.subr.mxu0 0.0
    %733 = vmatpush1.msra.mxu0 0.0
    %734 = vmatprep.subr.mxu0 0.0
    %735 = vmatpush1.msra.mxu0 0.0
    %736 = vmatprep.subr.mxu0 0.0
    %737 = vmatpush1.msra.mxu0 0.0
    %738 = vmatprep.subr.mxu0 0.0
    %739 = vmatpush1.msra.mxu0 0.0
    %740 = vmatprep.subr.mxu0 0.0
    %741 = vmatpush1.msra.mxu0 0.0
    %742 = vmatprep.subr.mxu0 0.0
    %743 = vmatpush1.msra.mxu0 0.0
    %744 = vmatprep.subr.mxu0 0.0
    %745 = vmatpush1.msra.mxu0 0.0
    %746 = vmatprep.subr.mxu0 0.0
    %747 = vmatpush1.msra.mxu0 0.0
    %748 = vmatprep.subr.mxu0 0.0
    %749 = vmatpush1.msra.mxu0 0.0
    %750 = vmatprep.subr.mxu0 0.0
    %751 = vmatpush1.msra.mxu0 0.0
    %752 = vmatprep.subr.mxu0 0.0
    %753 = vmatpush1.msra.mxu0 0.0
    %754 = vmatprep.subr.mxu0 0.0
    %755 = vmatpush1.msra.mxu0 0.0
    %756 = vmatprep.subr.mxu0 0.0
    %757 = vmatpush1.msra.mxu0 0.0
    %758 = vmatprep.subr.mxu0 0.0
    %759 = vmatpush1.msra.mxu0 0.0
    %760 = vmatprep.subr.mxu0 0.0
    %761 = vmatpush1.msra.mxu0 0.0
    %762 = vmatprep.subr.mxu0 0.0
    %763 = vmatpush1.msra.mxu0 0.0
    %764 = vmatprep.subr.mxu0 0.0
    %765 = vmatpush1.msra.mxu0 0.0
    %766 = vmatprep.subr.mxu0 0.0
    %767 = vmatpush1.msra.mxu0 0.0
    %768 = vmatprep.subr.mxu0 0.0
    %769 = vmatpush1.msra.mxu0 0.0
    %770 = vmatprep.subr.mxu0 0.0
    %771 = vmatpush1.msra.mxu0 0.0
    %772 = vmatprep.subr.mxu0 0.0
    %773 = vmatpush1.msra.mxu0 0.0
    %774 = vmatprep.subr.mxu0 0.0
    %775 = vmatpush1.msra.mxu0 0.0
    %776 = vmatprep.subr.mxu0 0.0
    %777 = vmatpush1.msra.mxu0 0.0
    %778 = vmatprep.subr.mxu0 0.0
    %779 = vmatpush1.msra.mxu0 0.0
    %780 = vmatprep.subr.mxu0 0.0
    %781 = vmatpush1.msra.mxu0 0.0
    %782 = vmatprep.subr.mxu0 0.0
    %783 = vmatpush1.msra.mxu0 0.0
    %784 = vmatprep.subr.mxu0 0.0
    %785 = vmatpush1.msra.mxu0 0.0
    %786 = vmatprep.mubr.f32.mxu0 0.0
    %787 = vmatmul.mubr.f32.gmra.mrb[0].mxu0 %v720
    %v788 = vpop.f32.mrb[0].mxu0
    %v789 = vadd.f32 0.0, %v788
    %v790 = vpop.f32.mrb[0].mxu0
    %791 = vdwg.mxu0
    %v792 = vadd.f32 %v716, %v789
    %v793 = vtanh.pop %v792
    %v794 = vmul.f32 %v793, %v208
    %v795 = vadd.f32 %v794, %v215
    %v796 = vmul.f32 %v795, %v708
    %798 = vrot.lane.b32.xlu0 %v795, 64
    %v799 = vpop.permute.xlu0 %798
    %v801 = vmul.f32 %v795, %v799
    %803 = vrot.lane.b32.xlu0 %v801, 32
    %v804 = vpop.permute.xlu0 %803
    %v806 = vadd.f32 %v796, %v804
    %v807 = vtanh.pop %v806
    %809 = vrot.lane.b32.xlu0 %v807, 64
    %v810 = vpop.permute.xlu0 %809
    %v812 = vmul.f32 %v795, %v810
    %s813 = scalar_lea.vmem [#allocation2], 48
    %v814 = vld [vmem:[%s813] sm:$0xff]
    %816 = vrot.lane.b32.xlu0 %v812, 32
    %v817 = vpop.permute.xlu0 %816
    %v818 = vsel %vm224, %v817, 0
    %820 = vmatprep.subr.mxu0 0.0
    %821 = vmatpush1.msra.mxu0 %v220
    %822 = vmatprep.subr.mxu0 0.0
    %823 = vmatpush1.msra.mxu0 %v221
    %824 = vmatprep.subr.mxu0 0.0
    %825 = vmatpush1.msra.mxu0 %v222
    %826 = vmatprep.subr.mxu0 0.0
    %827 = vmatpush1.msra.mxu0 %v223
    %828 = vmatprep.subr.mxu0 0.0
    %829 = vmatpush1.msra.mxu0 0.0
    %830 = vmatprep.subr.mxu0 0.0
    %831 = vmatpush1.msra.mxu0 0.0
    %832 = vmatprep.subr.mxu0 0.0
    %833 = vmatpush1.msra.mxu0 0.0
    %834 = vmatprep.subr.mxu0 0.0
    %835 = vmatpush1.msra.mxu0 0.0
    %836 = vmatprep.subr.mxu0 0.0
    %837 = vmatpush1.msra.mxu0 0.0
    %838 = vmatprep.subr.mxu0 0.0
    %839 = vmatpush1.msra.mxu0 0.0
    %840 = vmatprep.subr.mxu0 0.0
    %841 = vmatpush1.msra.mxu0 0.0
    %842 = vmatprep.subr.mxu0 0.0
    %843 = vmatpush1.msra.mxu0 0.0
    %844 = vmatprep.subr.mxu0 0.0
    %845 = vmatpush1.msra.mxu0 0.0
    %846 = vmatprep.subr.mxu0 0.0
    %847 = vmatpush1.msra.mxu0 0.0
    %848 = vmatprep.subr.mxu0 0.0
    %849 = vmatpush1.msra.mxu0 0.0
    %850 = vmatprep.subr.mxu0 0.0
    %851 = vmatpush1.msra.mxu0 0.0
    %852 = vmatprep.subr.mxu0 0.0
    %853 = vmatpush1.msra.mxu0 0.0
    %854 = vmatprep.subr.mxu0 0.0
    %855 = vmatpush1.msra.mxu0 0.0
    %856 = vmatprep.subr.mxu0 0.0
    %857 = vmatpush1.msra.mxu0 0.0
    %858 = vmatprep.subr.mxu0 0.0
    %859 = vmatpush1.msra.mxu0 0.0
    %860 = vmatprep.subr.mxu0 0.0
    %861 = vmatpush1.msra.mxu0 0.0
    %862 = vmatprep.subr.mxu0 0.0
    %863 = vmatpush1.msra.mxu0 0.0
    %864 = vmatprep.subr.mxu0 0.0
    %865 = vmatpush1.msra.mxu0 0.0
    %866 = vmatprep.subr.mxu0 0.0
    %867 = vmatpush1.msra.mxu0 0.0
    %868 = vmatprep.subr.mxu0 0.0
    %869 = vmatpush1.msra.mxu0 0.0
    %870 = vmatprep.subr.mxu0 0.0
    %871 = vmatpush1.msra.mxu0 0.0
    %872 = vmatprep.subr.mxu0 0.0
    %873 = vmatpush1.msra.mxu0 0.0
    %874 = vmatprep.subr.mxu0 0.0
    %875 = vmatpush1.msra.mxu0 0.0
    %876 = vmatprep.subr.mxu0 0.0
    %877 = vmatpush1.msra.mxu0 0.0
    %878 = vmatprep.subr.mxu0 0.0
    %879 = vmatpush1.msra.mxu0 0.0
    %880 = vmatprep.subr.mxu0 0.0
    %881 = vmatpush1.msra.mxu0 0.0
    %882 = vmatprep.subr.mxu0 0.0
    %883 = vmatpush1.msra.mxu0 0.0
    %884 = vmatprep.mubr.f32.mxu0 0.0
    %885 = vmatmul.mubr.f32.gmra.mrb[0].mxu0 %v818
    %v886 = vpop.f32.mrb[0].mxu0
    %v887 = vadd.f32 0.0, %v886
    %v888 = vpop.f32.mrb[0].mxu0
    %889 = vdwg.mxu0
    %v890 = vadd.f32 %v814, %v887
    %v891 = vtanh.pop %v890
    %v892 = vmul.f32 %v891, %v208
    %v893 = vadd.f32 %v892, %v215
    %v894 = vmul.f32 %v893, %v806
    %896 = vrot.lane.b32.xlu0 %v893, 64
    %v897 = vpop.permute.xlu0 %896
    %v899 = vmul.f32 %v893, %v897
    %901 = vrot.lane.b32.xlu0 %v899, 32
    %v902 = vpop.permute.xlu0 %901
    %v904 = vadd.f32 %v894, %v902
    %v905 = vtanh.pop %v904
    %907 = vrot.lane.b32.xlu0 %v905, 64
    %v908 = vpop.permute.xlu0 %907
    %v910 = vmul.f32 %v893, %v908
    %s911 = scalar_lea.vmem [#allocation2], 56
    %v912 = vld [vmem:[%s911] sm:$0xff]
    %914 = vrot.lane.b32.xlu0 %v910, 32
    %v915 = vpop.permute.xlu0 %914
    %v916 = vsel %vm224, %v915, 0
    %918 = vmatprep.subr.mxu0 0.0
    %919 = vmatpush1.msra.mxu0 %v220
    %920 = vmatprep.subr.mxu0 0.0
    %921 = vmatpush1.msra.mxu0 %v221
    %922 = vmatprep.subr.mxu0 0.0
    %923 = vmatpush1.msra.mxu0 %v222
    %924 = vmatprep.subr.mxu0 0.0
    %925 = vmatpush1.msra.mxu0 %v223
    %926 = vmatprep.subr.mxu0 0.0
    %927 = vmatpush1.msra.mxu0 0.0
    %928 = vmatprep.subr.mxu0 0.0
    %929 = vmatpush1.msra.mxu0 0.0
    %930 = vmatprep.subr.mxu0 0.0
    %931 = vmatpush1.msra.mxu0 0.0
    %932 = vmatprep.subr.mxu0 0.0
    %933 = vmatpush1.msra.mxu0 0.0
    %934 = vmatprep.subr.mxu0 0.0
    %935 = vmatpush1.msra.mxu0 0.0
    %936 = vmatprep.subr.mxu0 0.0
    %937 = vmatpush1.msra.mxu0 0.0
    %938 = vmatprep.subr.mxu0 0.0
    %939 = vmatpush1.msra.mxu0 0.0
    %940 = vmatprep.subr.mxu0 0.0
    %941 = vmatpush1.msra.mxu0 0.0
    %942 = vmatprep.subr.mxu0 0.0
    %943 = vmatpush1.msra.mxu0 0.0
    %944 = vmatprep.subr.mxu0 0.0
    %945 = vmatpush1.msra.mxu0 0.0
    %946 = vmatprep.subr.mxu0 0.0
    %947 = vmatpush1.msra.mxu0 0.0
    %948 = vmatprep.subr.mxu0 0.0
    %949 = vmatpush1.msra.mxu0 0.0
    %950 = vmatprep.subr.mxu0 0.0
    %951 = vmatpush1.msra.mxu0 0.0
    %952 = vmatprep.subr.mxu0 0.0
    %953 = vmatpush1.msra.mxu0 0.0
    %954 = vmatprep.subr.mxu0 0.0
    %955 = vmatpush1.msra.mxu0 0.0
    %956 = vmatprep.subr.mxu0 0.0
    %957 = vmatpush1.msra.mxu0 0.0
    %958 = vmatprep.subr.mxu0 0.0
    %959 = vmatpush1.msra.mxu0 0.0
    %960 = vmatprep.subr.mxu0 0.0
    %961 = vmatpush1.msra.mxu0 0.0
    %962 = vmatprep.subr.mxu0 0.0
    %963 = vmatpush1.msra.mxu0 0.0
    %964 = vmatprep.subr.mxu0 0.0
    %965 = vmatpush1.msra.mxu0 0.0
    %966 = vmatprep.subr.mxu0 0.0
    %967 = vmatpush1.msra.mxu0 0.0
    %968 = vmatprep.subr.mxu0 0.0
    %969 = vmatpush1.msra.mxu0 0.0
    %970 = vmatprep.subr.mxu0 0.0
    %971 = vmatpush1.msra.mxu0 0.0
    %972 = vmatprep.subr.mxu0 0.0
    %973 = vmatpush1.msra.mxu0 0.0
    %974 = vmatprep.subr.mxu0 0.0
    %975 = vmatpush1.msra.mxu0 0.0
    %976 = vmatprep.subr.mxu0 0.0
    %977 = vmatpush1.msra.mxu0 0.0
    %978 = vmatprep.subr.mxu0 0.0
    %979 = vmatpush1.msra.mxu0 0.0
    %980 = vmatprep.subr.mxu0 0.0
    %981 = vmatpush1.msra.mxu0 0.0
    %982 = vmatprep.mubr.f32.mxu0 0.0
    %983 = vmatmul.mubr.f32.gmra.mrb[0].mxu0 %v916
    %v984 = vpop.f32.mrb[0].mxu0
    %v985 = vadd.f32 0.0, %v984
    %v986 = vpop.f32.mrb[0].mxu0
    %987 = vdwg.mxu0
    %v988 = vadd.f32 %v912, %v985
    %v989 = vtanh.pop %v988
    %v990 = vmul.f32 %v989, %v208
    %v991 = vadd.f32 %v990, %v215
    %v992 = vmul.f32 %v991, %v904
    %994 = vrot.lane.b32.xlu0 %v991, 64
    %v995 = vpop.permute.xlu0 %994
    %v997 = vmul.f32 %v991, %v995
    %999 = vrot.lane.b32.xlu0 %v997, 32
    %v1000 = vpop.permute.xlu0 %999
    %v1002 = vadd.f32 %v992, %v1000
    %v1003 = vtanh.pop %v1002
    %1005 = vrot.lane.b32.xlu0 %v1003, 64
    %v1006 = vpop.permute.xlu0 %1005
    %v1008 = vmul.f32 %v991, %v1006
    %v1009 = vld [vmem:[%s8] sm:$0xff]
    %v1010 = vld [vmem:[%s8 + $0x8] sm:$0xff]
    %v1011 = vld [vmem:[%s8 + $0x10] sm:$0xff]
    %v1012 = vld [vmem:[%s8 + $0x18] sm:$0xff]
    %v1013 = vld [vmem:[%s9] sm:$0x1]
    %v1015 = vlaneseq
    %v1016 = vshrl.u32 %v1015, 7
    %v1017 = vsub.s32 0, %v1016
    %v1018 = vrot.slane %v1013, %v1017
    %1021 = vrot.lane.b32.xlu0 %v1008, 32
    %v1022 = vpop.permute.xlu0 %1021
    %v1023 = vsel %vm224, %v1022, 0
    %1025 = vmatprep.subr.mxu0 0.0
    %1026 = vmatpush1.msra.mxu0 %v1009
    %1027 = vmatprep.subr.mxu0 0.0
    %1028 = vmatpush1.msra.mxu0 %v1010
    %1029 = vmatprep.subr.mxu0 0.0
    %1030 = vmatpush1.msra.mxu0 %v1011
    %1031 = vmatprep.subr.mxu0 0.0
    %1032 = vmatpush1.msra.mxu0 %v1012
    %1033 = vmatprep.subr.mxu0 0.0
    %1034 = vmatpush1.msra.mxu0 0.0
    %1035 = vmatprep.subr.mxu0 0.0
    %1036 = vmatpush1.msra.mxu0 0.0
    %1037 = vmatprep.subr.mxu0 0.0
    %1038 = vmatpush1.msra.mxu0 0.0
    %1039 = vmatprep.subr.mxu0 0.0
    %1040 = vmatpush1.msra.mxu0 0.0
    %1041 = vmatprep.subr.mxu0 0.0
    %1042 = vmatpush1.msra.mxu0 0.0
    %1043 = vmatprep.subr.mxu0 0.0
    %1044 = vmatpush1.msra.mxu0 0.0
    %1045 = vmatprep.subr.mxu0 0.0
    %1046 = vmatpush1.msra.mxu0 0.0
    %1047 = vmatprep.subr.mxu0 0.0
    %1048 = vmatpush1.msra.mxu0 0.0
    %1049 = vmatprep.subr.mxu0 0.0
    %1050 = vmatpush1.msra.mxu0 0.0
    %1051 = vmatprep.subr.mxu0 0.0
    %1052 = vmatpush1.msra.mxu0 0.0
    %1053 = vmatprep.subr.mxu0 0.0
    %1054 = vmatpush1.msra.mxu0 0.0
    %1055 = vmatprep.subr.mxu0 0.0
    %1056 = vmatpush1.msra.mxu0 0.0
    %1057 = vmatprep.subr.mxu0 0.0
    %1058 = vmatpush1.msra.mxu0 0.0
    %1059 = vmatprep.subr.mxu0 0.0
    %1060 = vmatpush1.msra.mxu0 0.0
    %1061 = vmatprep.subr.mxu0 0.0
    %1062 = vmatpush1.msra.mxu0 0.0
    %1063 = vmatprep.subr.mxu0 0.0
    %1064 = vmatpush1.msra.mxu0 0.0
    %1065 = vmatprep.subr.mxu0 0.0
    %1066 = vmatpush1.msra.mxu0 0.0
    %1067 = vmatprep.subr.mxu0 0.0
    %1068 = vmatpush1.msra.mxu0 0.0
    %1069 = vmatprep.subr.mxu0 0.0
    %1070 = vmatpush1.msra.mxu0 0.0
    %1071 = vmatprep.subr.mxu0 0.0
    %1072 = vmatpush1.msra.mxu0 0.0
    %1073 = vmatprep.subr.mxu0 0.0
    %1074 = vmatpush1.msra.mxu0 0.0
    %1075 = vmatprep.subr.mxu0 0.0
    %1076 = vmatpush1.msra.mxu0 0.0
    %1077 = vmatprep.subr.mxu0 0.0
    %1078 = vmatpush1.msra.mxu0 0.0
    %1079 = vmatprep.subr.mxu0 0.0
    %1080 = vmatpush1.msra.mxu0 0.0
    %1081 = vmatprep.subr.mxu0 0.0
    %1082 = vmatpush1.msra.mxu0 0.0
    %1083 = vmatprep.subr.mxu0 0.0
    %1084 = vmatpush1.msra.mxu0 0.0
    %1085 = vmatprep.subr.mxu0 0.0
    %1086 = vmatpush1.msra.mxu0 0.0
    %1087 = vmatprep.subr.mxu0 0.0
    %1088 = vmatpush1.msra.mxu0 0.0
    %1089 = vmatprep.mubr.f32.mxu0 0.0
    %1090 = vmatmul.mubr.f32.gmra.mrb[0].mxu0 %v1023
    %v1091 = vpop.f32.mrb[0].mxu0
    %v1092 = vadd.f32 %v1018, %v1091
    %v1093 = vpop.f32.mrb[0].mxu0
    %1094 = vdwg.mxu0
    %1095 = vst [vmem:[#allocation6] sm:$0xff] %v1092
    // Predicated region
    $region46: #{tpu_custom_call.1} parent=1 // pred_check
      _
    $region47: #{tpu_custom_call.1} parent=1 // pred_check_branch
      %1097 = sbr.rel (0) target = $region49
    $region48: #{tpu_custom_call.1} parent=1 // pred_region
      %s1099 = ssub.s32 128, 128
      %1100 = vsyncadd [#allocation5], %s1099
      %s1102 = sshll.u32 [#allocation6], 4
      %s1103 = int_to_ptr.vmem [resolvable:$true] %s1102
      %1105 = dma.vmem_to_hbm [thread:$0]  %s1103, 128, %s10, [#allocation5]
    $region49: #{tpu_custom_call.1} parent=1 // pred_fallthru
      _
    // Predicated region
    $region50: #{tpu_custom_call.1} parent=1 // pred_check
      _
    $region51: #{tpu_custom_call.1} parent=1 // pred_check_branch
      %1107 = sbr.rel (0) target = $region53
    $region52: #{tpu_custom_call.1} parent=1 // pred_region
      %1108 = dma.done [#allocation5], 128
    $region53: #{tpu_custom_call.1} parent=1 // pred_fallthru
      _
    %1109 = vsyncpa [#allocation4], 1
    %1110 = vsyncpa [#allocation5], 1

</llo_original>
